<compile_context>
chip_gen: v5e
topology: v5e:2x2
jax: 0.10.0
libtpu: 0.0.40
codegen_flags: <defaults>
</compile_context>

<pallas_src>
import functools

import jax
import jax.numpy as jnp
from jax.experimental import pallas as pl
from jax.experimental.pallas import tpu as pltpu

_LANE = 128                              # vreg lane width: last dim of every block
_SUBLANE = 8                             # f32 sublane count: batch tiles are multiples of this
_VMEM_FLOOR_BYTES = 64 * 1024 * 1024     # v7x per-TC physical VMEM (smallest of v5e/v6e/v7x)


def _round_up(v: int, m: int) -> int:
    return ((v + m - 1) // m) * m


def _fused_mlp_kernel(*refs, num_layers: int):
    """refs = (x_ref, w0_ref, b0_ref, ..., w{L-1}_ref, b{L-1}_ref, o_ref).

    The whole layer chain runs on the current batch tile without leaving VMEM:
    each layer is one MXU matmul (bf16 in, f32 accumulate) + f32 VPU bias add + ReLU.
    """
    x_ref = refs[0]
    o_ref = refs[-1]

    h = x_ref[...]                                     # (tm, d0_pad) bf16
    for l in range(num_layers):
        w_ref = refs[1 + 2 * l]                        # (dl_pad, dl1_pad) bf16, VMEM-resident
        b_ref = refs[2 + 2 * l]                        # (1, dl1_pad) f32
        acc = jnp.dot(h, w_ref[...], preferred_element_type=jnp.float32)
        acc = acc + b_ref[...]                         # broadcasts over rows, stays f32
        acc = jnp.maximum(acc, 0.0)                    # activation after EVERY LinearBlock
        # Next matmul operand back to bf16; final layer stays f32 for the store.
        h = acc.astype(jnp.bfloat16) if l + 1 < num_layers else acc
    o_ref[...] = h.astype(o_ref.dtype)


def multilayer_perception_forward(x, params, *, tile_m: int = 512):
    """Fused forward for MultilayerPerception.

    x: (B, dims[0]) float; params: list of (w: (d_in, d_out), b: (d_out,)) — weights are
    already stored transposed vs. PyTorch so the kernel computes y = x @ W + b directly.
    """
    B, in_dim = x.shape
    num_layers = len(params)
    dims = [in_dim] + [w.shape[1] for (w, _) in params]
    pdims = [_round_up(d, _LANE) for d in dims]        # lane-dense feature dims

    # ---- batch tiling --------------------------------------------------------
    B8 = _round_up(B, _SUBLANE)
    if B8 <= _SUBLANE:
        tm = B8                                        # tiny batch: single 8-row tile
    elif B8 <= 2 * tile_m:
        # >= 2 grid steps so v7x's two TensorCores both get work on the "parallel" axis.
        tm = _round_up(pl.cdiv(B8, 2), _SUBLANE)
    else:
        tm = tile_m
    B_pad = _round_up(B8, tm)
    grid = (B_pad // tm,)

    # ---- pad to lane-dense layout & convert dtypes ---------------------------
    x_p = jnp.pad(x.astype(jnp.bfloat16), ((0, B_pad - B), (0, pdims[0] - in_dim)))
    padded_params = []
    for l, (w, b) in enumerate(params):
        d_in, d_out = w.shape
        w_p = jnp.pad(w, ((0, pdims[l] - d_in), (0, pdims[l + 1] - d_out))).astype(jnp.bfloat16)
        b_p = jnp.pad(b.astype(jnp.float32), (0, pdims[l + 1] - d_out)).reshape(1, pdims[l + 1])
        padded_params.append((w_p, b_p))

    # ---- explicit VMEM budget (review item) ----------------------------------
    def _footprint(param_bufs: int) -> int:
        p = sum(w.nbytes + bb.nbytes for (w, bb) in padded_params) * param_bufs
        acts = 2 * tm * pdims[0] * 2                   # double-buffered bf16 input tile
        outs = 2 * tm * pdims[-1] * x.dtype.itemsize   # double-buffered output tile
        scratch = 2 * tm * max(pdims) * 4              # in-kernel f32 intermediates
        return p + acts + outs + scratch + (4 << 20)   # + headroom

    # ---- cost hint for the surrounding XLA graph -----------------------------
    cost = pl.CostEstimate(
        flops=int(2 * B_pad * sum(pdims[l] * pdims[l + 1] for l in range(num_layers))),
        transcendentals=0,
        bytes_accessed=int(x_p.nbytes
                           + sum(w.nbytes + bb.nbytes for (w, bb) in padded_params)
                           + B_pad * pdims[-1] * x.dtype.itemsize),
    )

    def _build_and_call(param_buffer_count):
        # Constant-index param specs are fetched exactly once; Buffered(1) halves
        # their resident VMEM cost vs. the default double buffering.
        if param_buffer_count is not None:
            spec_kwargs = {"pipeline_mode": pl.Buffered(param_buffer_count)}
            nbuf = param_buffer_count
        else:
            spec_kwargs = {}
            nbuf = 2

        footprint = _footprint(nbuf)
        if footprint > _VMEM_FLOOR_BYTES:
            # TODO(synk): fall back to per-layer calls / emit_pipeline weight streaming
            #             when the fully-resident weights exceed per-TC VMEM.
            raise ValueError(
                f"Resident MLP weights + tiles need ~{footprint} bytes of VMEM "
                f"(> {_VMEM_FLOOR_BYTES}); reduce tile_m or stream weights.")

        in_specs = [pl.BlockSpec((tm, pdims[0]), lambda i: (i, 0))]
        flat_args = [x_p]
        for (w_p, b_p) in padded_params:
            in_specs.append(pl.BlockSpec(w_p.shape, lambda i: (0, 0), **spec_kwargs))
            in_specs.append(pl.BlockSpec(b_p.shape, lambda i: (0, 0), **spec_kwargs))
            flat_args.append(w_p)
            flat_args.append(b_p)

        kernel = functools.partial(_fused_mlp_kernel, num_layers=num_layers)
        return pl.pallas_call(
            kernel,
            out_shape=jax.ShapeDtypeStruct((B_pad, pdims[-1]), x.dtype),
            grid=grid,
            in_specs=in_specs,
            out_specs=pl.BlockSpec((tm, pdims[-1]), lambda i: (i, 0)),
            compiler_params=pltpu.CompilerParams(
                dimension_semantics=("parallel",),
                vmem_limit_bytes=int(min(max(footprint, 8 << 20), _VMEM_FLOOR_BYTES)),
            ),
            cost_estimate=cost,
        )(*flat_args)

    try:
        out_full = _build_and_call(1)
    except Exception:
        # Safety net: if this Pallas/Mosaic version rejects single-buffered specs,
        # fall back to default double buffering (correctness identical).
        out_full = _build_and_call(None)

    # Slice away batch-row and lane padding.
    return out_full[:B, :dims[-1]]


def init_mlp_params(key, dims):
    """Deterministic init matching nn.Linear's uniform(-1/sqrt(fan_in), 1/sqrt(fan_in))."""
    params = []
    for i in range(1, len(dims)):
        in_dim, out_dim = dims[i - 1], dims[i]
        key, kw, kb = jax.random.split(key, 3)
        bound = 1.0 / jnp.sqrt(in_dim)
        # Store weight already transposed: (in_dim, out_dim).
        w = jax.random.uniform(kw, (in_dim, out_dim), jnp.float32, -bound, bound)
        b = jax.random.uniform(kb, (out_dim,), jnp.float32, -bound, bound)
        params.append((w, b))
    return params


if __name__ == "__main__":
    key = jax.random.PRNGKey(0)
    dims = (16, 32, 32, 8)   # MultilayerPerception(dims=[16, 32, 32, 8], ..., activation=nn.ReLU)
    batch = 4

    kx, kp = jax.random.split(key)
    x = jax.random.normal(kx, (batch, dims[0]), jnp.float32)
    params = init_mlp_params(kp, dims)

    out = multilayer_perception_forward(x, params)
    out = jax.block_until_ready(out)
    assert out.shape == (batch, dims[-1])

    # Pure-JAX f32 reference of the module forward (Linear -> ReLU per block; dropout = identity).
    # Tolerance loosened because the kernel runs the matmul chain in bf16 with f32 accumulation.
    ref = x
    for (w, b) in params:
        ref = jnp.maximum(ref @ w + b, 0.0)
    assert jnp.allclose(out, ref, atol=5e-2, rtol=5e-2), "mismatch vs f32 reference"

    print("KERNEL_OK")
</pallas_src>

<mosaic_0001>
module attributes {stable_mosaic.version = 11 : i64} {
  func.func @_fused_mlp_kernel(%arg0: i32, %arg1: memref<8x128xbf16, #tpu.memory_space<vmem>>, %arg2: memref<128x128xbf16, #tpu.memory_space<vmem>>, %arg3: memref<1x128xf32, #tpu.memory_space<vmem>>, %arg4: memref<128x128xbf16, #tpu.memory_space<vmem>>, %arg5: memref<1x128xf32, #tpu.memory_space<vmem>>, %arg6: memref<128x128xbf16, #tpu.memory_space<vmem>>, %arg7: memref<1x128xf32, #tpu.memory_space<vmem>>, %arg8: memref<8x128xf32, #tpu.memory_space<vmem>>) attributes {dimension_semantics = [#tpu.dimension_semantics<parallel>], iteration_bounds = array<i64: 1>, scalar_prefetch = 0 : i64, scratch_operands = 0 : i64, tpu.core_type = #tpu.core_type<tc>, window_params = [{transform_indices = @transform_0, window_bounds = array<i64: 8, 128>}, {pipeline_mode = #tpu.pipeline_mode<synchronous>, transform_indices = @transform_1, window_bounds = array<i64: 128, 128>}, {pipeline_mode = #tpu.pipeline_mode<synchronous>, transform_indices = @transform_2, window_bounds = array<i64: 1, 128>}, {pipeline_mode = #tpu.pipeline_mode<synchronous>, transform_indices = @transform_3, window_bounds = array<i64: 128, 128>}, {pipeline_mode = #tpu.pipeline_mode<synchronous>, transform_indices = @transform_4, window_bounds = array<i64: 1, 128>}, {pipeline_mode = #tpu.pipeline_mode<synchronous>, transform_indices = @transform_5, window_bounds = array<i64: 128, 128>}, {pipeline_mode = #tpu.pipeline_mode<synchronous>, transform_indices = @transform_6, window_bounds = array<i64: 1, 128>}, {transform_indices = @transform_7, window_bounds = array<i64: 8, 128>}]} {
    %c0 = arith.constant 0 : index
    %c0_0 = arith.constant 0 : index
    %0 = vector.load %arg1[%c0, %c0_0] : memref<8x128xbf16, #tpu.memory_space<vmem>>, vector<8x128xbf16>
    %c0_1 = arith.constant 0 : index
    %c0_2 = arith.constant 0 : index
    %1 = vector.load %arg2[%c0_1, %c0_2] : memref<128x128xbf16, #tpu.memory_space<vmem>>, vector<128x128xbf16>
    %cst = arith.constant dense<0.000000e+00> : vector<8x128xf32>
    %2 = tpu.matmul %0, %1, %cst {dimension_numbers = #tpu.dot_dimension_numbers<[1], [0], [0], [1], [0, 0, 1, 1], [], []>} : vector<8x128xbf16>, vector<128x128xbf16>, vector<8x128xf32> -> vector<8x128xf32>
    %c0_3 = arith.constant 0 : index
    %c0_4 = arith.constant 0 : index
    %3 = vector.load %arg3[%c0_3, %c0_4] : memref<1x128xf32, #tpu.memory_space<vmem>>, vector<1x128xf32>
    %4 = vector.broadcast %3 : vector<1x128xf32> to vector<8x128xf32>
    %5 = arith.addf %2, %4 : vector<8x128xf32>
    %cst_5 = arith.constant 0.000000e+00 : f32
    %6 = vector.broadcast %cst_5 : f32 to vector<8x128xf32>
    %7 = arith.maximumf %5, %6 : vector<8x128xf32>
    %8 = arith.truncf %7 : vector<8x128xf32> to vector<8x128xbf16>
    %c0_6 = arith.constant 0 : index
    %c0_7 = arith.constant 0 : index
    %9 = vector.load %arg4[%c0_6, %c0_7] : memref<128x128xbf16, #tpu.memory_space<vmem>>, vector<128x128xbf16>
    %cst_8 = arith.constant dense<0.000000e+00> : vector<8x128xf32>
    %10 = tpu.matmul %8, %9, %cst_8 {dimension_numbers = #tpu.dot_dimension_numbers<[1], [0], [0], [1], [0, 0, 1, 1], [], []>} : vector<8x128xbf16>, vector<128x128xbf16>, vector<8x128xf32> -> vector<8x128xf32>
    %c0_9 = arith.constant 0 : index
    %c0_10 = arith.constant 0 : index
    %11 = vector.load %arg5[%c0_9, %c0_10] : memref<1x128xf32, #tpu.memory_space<vmem>>, vector<1x128xf32>
    %12 = vector.broadcast %11 : vector<1x128xf32> to vector<8x128xf32>
    %13 = arith.addf %10, %12 : vector<8x128xf32>
    %cst_11 = arith.constant 0.000000e+00 : f32
    %14 = vector.broadcast %cst_11 : f32 to vector<8x128xf32>
    %15 = arith.maximumf %13, %14 : vector<8x128xf32>
    %16 = arith.truncf %15 : vector<8x128xf32> to vector<8x128xbf16>
    %c0_12 = arith.constant 0 : index
    %c0_13 = arith.constant 0 : index
    %17 = vector.load %arg6[%c0_12, %c0_13] : memref<128x128xbf16, #tpu.memory_space<vmem>>, vector<128x128xbf16>
    %cst_14 = arith.constant dense<0.000000e+00> : vector<8x128xf32>
    %18 = tpu.matmul %16, %17, %cst_14 {dimension_numbers = #tpu.dot_dimension_numbers<[1], [0], [0], [1], [0, 0, 1, 1], [], []>} : vector<8x128xbf16>, vector<128x128xbf16>, vector<8x128xf32> -> vector<8x128xf32>
    %c0_15 = arith.constant 0 : index
    %c0_16 = arith.constant 0 : index
    %19 = vector.load %arg7[%c0_15, %c0_16] : memref<1x128xf32, #tpu.memory_space<vmem>>, vector<1x128xf32>
    %20 = vector.broadcast %19 : vector<1x128xf32> to vector<8x128xf32>
    %21 = arith.addf %18, %20 : vector<8x128xf32>
    %cst_17 = arith.constant 0.000000e+00 : f32
    %22 = vector.broadcast %cst_17 : f32 to vector<8x128xf32>
    %23 = arith.maximumf %21, %22 : vector<8x128xf32>
    %c0_18 = arith.constant 0 : index
    %c0_19 = arith.constant 0 : index
    %24 = vector.load %arg8[%c0_18, %c0_19] : memref<8x128xf32, #tpu.memory_space<vmem>>, vector<8x128xf32>
    tpu.vector_store %arg8[%c0_18, %c0_19], %23 {strides = array<i32>} : memref<8x128xf32, #tpu.memory_space<vmem>>, vector<8x128xf32>,
    return
  }
  func.func @transform_0(%arg0: i32) -> (i32, i32) {
    %c0_i32 = arith.constant 0 : i32
    %c0_i32_0 = arith.constant 0 : i32
    return %arg0, %c0_i32 : i32, i32
  }
  func.func @transform_1(%arg0: i32) -> (i32, i32) {
    %c0_i32 = arith.constant 0 : i32
    %c0_i32_0 = arith.constant 0 : i32
    %c0_i32_1 = arith.constant 0 : i32
    return %c0_i32, %c0_i32_0 : i32, i32
  }
  func.func @transform_2(%arg0: i32) -> (i32, i32) {
    %c0_i32 = arith.constant 0 : i32
    %c0_i32_0 = arith.constant 0 : i32
    %c0_i32_1 = arith.constant 0 : i32
    return %c0_i32, %c0_i32_0 : i32, i32
  }
  func.func @transform_3(%arg0: i32) -> (i32, i32) {
    %c0_i32 = arith.constant 0 : i32
    %c0_i32_0 = arith.constant 0 : i32
    %c0_i32_1 = arith.constant 0 : i32
    return %c0_i32, %c0_i32_0 : i32, i32
  }
  func.func @transform_4(%arg0: i32) -> (i32, i32) {
    %c0_i32 = arith.constant 0 : i32
    %c0_i32_0 = arith.constant 0 : i32
    %c0_i32_1 = arith.constant 0 : i32
    return %c0_i32, %c0_i32_0 : i32, i32
  }
  func.func @transform_5(%arg0: i32) -> (i32, i32) {
    %c0_i32 = arith.constant 0 : i32
    %c0_i32_0 = arith.constant 0 : i32
    %c0_i32_1 = arith.constant 0 : i32
    return %c0_i32, %c0_i32_0 : i32, i32
  }
  func.func @transform_6(%arg0: i32) -> (i32, i32) {
    %c0_i32 = arith.constant 0 : i32
    %c0_i32_0 = arith.constant 0 : i32
    %c0_i32_1 = arith.constant 0 : i32
    return %c0_i32, %c0_i32_0 : i32, i32
  }
  func.func @transform_7(%arg0: i32) -> (i32, i32) {
    %c0_i32 = arith.constant 0 : i32
    %c0_i32_0 = arith.constant 0 : i32
    return %arg0, %c0_i32 : i32, i32
  }
}

module attributes {stable_mosaic.version = 11 : i64} {
  func.func @_fused_mlp_kernel(%arg0: i32, %arg1: memref<8x128xbf16, #tpu.memory_space<vmem>>, %arg2: memref<128x128xbf16, #tpu.memory_space<vmem>>, %arg3: memref<1x128xf32, #tpu.memory_space<vmem>>, %arg4: memref<128x128xbf16, #tpu.memory_space<vmem>>, %arg5: memref<1x128xf32, #tpu.memory_space<vmem>>, %arg6: memref<128x128xbf16, #tpu.memory_space<vmem>>, %arg7: memref<1x128xf32, #tpu.memory_space<vmem>>, %arg8: memref<8x128xf32, #tpu.memory_space<vmem>>) attributes {dimension_semantics = [#tpu.dimension_semantics<parallel>], iteration_bounds = array<i64: 1>, scalar_prefetch = 0 : i64, scratch_operands = 0 : i64, tpu.core_type = #tpu.core_type<tc>, window_params = [{transform_indices = @transform_0, window_bounds = array<i64: 8, 128>}, {pipeline_mode = #tpu.pipeline_mode<synchronous>, transform_indices = @transform_1, window_bounds = array<i64: 128, 128>}, {pipeline_mode = #tpu.pipeline_mode<synchronous>, transform_indices = @transform_2, window_bounds = array<i64: 1, 128>}, {pipeline_mode = #tpu.pipeline_mode<synchronous>, transform_indices = @transform_3, window_bounds = array<i64: 128, 128>}, {pipeline_mode = #tpu.pipeline_mode<synchronous>, transform_indices = @transform_4, window_bounds = array<i64: 1, 128>}, {pipeline_mode = #tpu.pipeline_mode<synchronous>, transform_indices = @transform_5, window_bounds = array<i64: 128, 128>}, {pipeline_mode = #tpu.pipeline_mode<synchronous>, transform_indices = @transform_6, window_bounds = array<i64: 1, 128>}, {transform_indices = @transform_7, window_bounds = array<i64: 8, 128>}]} {
    %c0 = arith.constant 0 : index
    %c0_0 = arith.constant 0 : index
    %0 = vector.load %arg1[%c0, %c0_0] : memref<8x128xbf16, #tpu.memory_space<vmem>>, vector<8x128xbf16>
    %c0_1 = arith.constant 0 : index
    %c0_2 = arith.constant 0 : index
    %1 = vector.load %arg2[%c0_1, %c0_2] : memref<128x128xbf16, #tpu.memory_space<vmem>>, vector<128x128xbf16>
    %cst = arith.constant dense<0.000000e+00> : vector<8x128xf32>
    %2 = tpu.matmul %0, %1, %cst {dimension_numbers = #tpu.dot_dimension_numbers<[1], [0], [0], [1], [0, 0, 1, 1], [], []>} : vector<8x128xbf16>, vector<128x128xbf16>, vector<8x128xf32> -> vector<8x128xf32>
    %c0_3 = arith.constant 0 : index
    %c0_4 = arith.constant 0 : index
    %3 = vector.load %arg3[%c0_3, %c0_4] : memref<1x128xf32, #tpu.memory_space<vmem>>, vector<1x128xf32>
    %4 = vector.broadcast %3 : vector<1x128xf32> to vector<8x128xf32>
    %5 = arith.addf %2, %4 : vector<8x128xf32>
    %cst_5 = arith.constant 0.000000e+00 : f32
    %6 = vector.broadcast %cst_5 : f32 to vector<8x128xf32>
    %7 = arith.maximumf %5, %6 : vector<8x128xf32>
    %8 = arith.truncf %7 : vector<8x128xf32> to vector<8x128xbf16>
    %c0_6 = arith.constant 0 : index
    %c0_7 = arith.constant 0 : index
    %9 = vector.load %arg4[%c0_6, %c0_7] : memref<128x128xbf16, #tpu.memory_space<vmem>>, vector<128x128xbf16>
    %cst_8 = arith.constant dense<0.000000e+00> : vector<8x128xf32>
    %10 = tpu.matmul %8, %9, %cst_8 {dimension_numbers = #tpu.dot_dimension_numbers<[1], [0], [0], [1], [0, 0, 1, 1], [], []>} : vector<8x128xbf16>, vector<128x128xbf16>, vector<8x128xf32> -> vector<8x128xf32>
    %c0_9 = arith.constant 0 : index
    %c0_10 = arith.constant 0 : index
    %11 = vector.load %arg5[%c0_9, %c0_10] : memref<1x128xf32, #tpu.memory_space<vmem>>, vector<1x128xf32>
    %12 = vector.broadcast %11 : vector<1x128xf32> to vector<8x128xf32>
    %13 = arith.addf %10, %12 : vector<8x128xf32>
    %cst_11 = arith.constant 0.000000e+00 : f32
    %14 = vector.broadcast %cst_11 : f32 to vector<8x128xf32>
    %15 = arith.maximumf %13, %14 : vector<8x128xf32>
    %16 = arith.truncf %15 : vector<8x128xf32> to vector<8x128xbf16>
    %c0_12 = arith.constant 0 : index
    %c0_13 = arith.constant 0 : index
    %17 = vector.load %arg6[%c0_12, %c0_13] : memref<128x128xbf16, #tpu.memory_space<vmem>>, vector<128x128xbf16>
    %cst_14 = arith.constant dense<0.000000e+00> : vector<8x128xf32>
    %18 = tpu.matmul %16, %17, %cst_14 {dimension_numbers = #tpu.dot_dimension_numbers<[1], [0], [0], [1], [0, 0, 1, 1], [], []>} : vector<8x128xbf16>, vector<128x128xbf16>, vector<8x128xf32> -> vector<8x128xf32>
    %c0_15 = arith.constant 0 : index
    %c0_16 = arith.constant 0 : index
    %19 = vector.load %arg7[%c0_15, %c0_16] : memref<1x128xf32, #tpu.memory_space<vmem>>, vector<1x128xf32>
    %20 = vector.broadcast %19 : vector<1x128xf32> to vector<8x128xf32>
    %21 = arith.addf %18, %20 : vector<8x128xf32>
    %cst_17 = arith.constant 0.000000e+00 : f32
    %22 = vector.broadcast %cst_17 : f32 to vector<8x128xf32>
    %23 = arith.maximumf %21, %22 : vector<8x128xf32>
    %c0_18 = arith.constant 0 : index
    %c0_19 = arith.constant 0 : index
    %24 = vector.load %arg8[%c0_18, %c0_19] : memref<8x128xf32, #tpu.memory_space<vmem>>, vector<8x128xf32>
    tpu.vector_store %arg8[%c0_18, %c0_19], %23 {strides = array<i32>} : memref<8x128xf32, #tpu.memory_space<vmem>>, vector<8x128xf32>,
    return
  }
  func.func @transform_0(%arg0: i32) -> (i32, i32) {
    %c0_i32 = arith.constant 0 : i32
    %c0_i32_0 = arith.constant 0 : i32
    return %arg0, %c0_i32 : i32, i32
  }
  func.func @transform_1(%arg0: i32) -> (i32, i32) {
    %c0_i32 = arith.constant 0 : i32
    %c0_i32_0 = arith.constant 0 : i32
    %c0_i32_1 = arith.constant 0 : i32
    return %c0_i32, %c0_i32_0 : i32, i32
  }
  func.func @transform_2(%arg0: i32) -> (i32, i32) {
    %c0_i32 = arith.constant 0 : i32
    %c0_i32_0 = arith.constant 0 : i32
    %c0_i32_1 = arith.constant 0 : i32
    return %c0_i32, %c0_i32_0 : i32, i32
  }
  func.func @transform_3(%arg0: i32) -> (i32, i32) {
    %c0_i32 = arith.constant 0 : i32
    %c0_i32_0 = arith.constant 0 : i32
    %c0_i32_1 = arith.constant 0 : i32
    return %c0_i32, %c0_i32_0 : i32, i32
  }
  func.func @transform_4(%arg0: i32) -> (i32, i32) {
    %c0_i32 = arith.constant 0 : i32
    %c0_i32_0 = arith.constant 0 : i32
    %c0_i32_1 = arith.constant 0 : i32
    return %c0_i32, %c0_i32_0 : i32, i32
  }
  func.func @transform_5(%arg0: i32) -> (i32, i32) {
    %c0_i32 = arith.constant 0 : i32
    %c0_i32_0 = arith.constant 0 : i32
    %c0_i32_1 = arith.constant 0 : i32
    return %c0_i32, %c0_i32_0 : i32, i32
  }
  func.func @transform_6(%arg0: i32) -> (i32, i32) {
    %c0_i32 = arith.constant 0 : i32
    %c0_i32_0 = arith.constant 0 : i32
    %c0_i32_1 = arith.constant 0 : i32
    return %c0_i32, %c0_i32_0 : i32, i32
  }
  func.func @transform_7(%arg0: i32) -> (i32, i32) {
    %c0_i32 = arith.constant 0 : i32
    %c0_i32_0 = arith.constant 0 : i32
    return %arg0, %c0_i32 : i32, i32
  }
}

</mosaic_0001>

<llo_original>
// kernel: tpu_custom_call.1
$region0: #{tpu_custom_call.1}
  #allocation0 [shape = 'u32[]', space=smem, size = 0x4, offset = 0x4, fixed_abs, tag = 'smem constant byte address 0x4 - core index']
  #allocation1 [shape = 'u32[72,128]{1,0:T(1,128)}', space=vmem, size = 0x9000, scoped, tag = 'internal scratch']
  %s0 = inlined_call_operand.hbm [shape: bf16[8,128], index: 0, kind: input, shape index: {}]
  %s1 = inlined_call_operand.hbm [shape: bf16[128,128], index: 1, kind: input, shape index: {}]
  %s2 = inlined_call_operand.vmem [shape: f32[1,128], index: 2, kind: input, shape index: {}]
  %s3 = inlined_call_operand.hbm [shape: bf16[128,128], index: 3, kind: input, shape index: {}]
  %s4 = inlined_call_operand.vmem [shape: f32[1,128], index: 4, kind: input, shape index: {}]
  %s5 = inlined_call_operand.hbm [shape: bf16[128,128], index: 5, kind: input, shape index: {}]
  %s6 = inlined_call_operand.vmem [shape: f32[1,128], index: 6, kind: input, shape index: {}]
  %s7 = inlined_call_operand.hbm [shape: f32[8,128], index: 7, kind: output, shape index: {}]
  %s8 = sld [smem:[#allocation0]]
  $region54: #{tpu_custom_call.1} parent=0
    _
  %s10 = ssub.s32 1, %s8
  %s11 = scalar_select 0, %s10, %s8
  $region1: #{tpu_custom_call.1} parent=0
    #allocation2 [shape = 'u8[2048]{0}', space=vmem, size = 0x800, scoped, tag = 'input window, operand 0, single buffered']
    #allocation3 [shape = 's32[1]{0}', space=sflag, size = 0x4, scoped, tag = 'scoped memory for tpu_custom_call.1']
    #allocation4 [shape = 's32[1]{0}', space=sflag, size = 0x4, scoped, tag = 'scoped memory for tpu_custom_call.1']
    #allocation5 [shape = 'u8[32768]{0}', space=vmem, size = 0x8000, scoped, tag = 'input window, operand 1, single buffered']
    #allocation6 [shape = 's32[1]{0}', space=sflag, size = 0x4, scoped, tag = 'scoped memory for tpu_custom_call.1']
    #allocation7 [shape = 'u8[32768]{0}', space=vmem, size = 0x8000, scoped, tag = 'input window, operand 3, single buffered']
    #allocation8 [shape = 'u8[32768]{0}', space=vmem, size = 0x8000, scoped, tag = 'input window, operand 5, single buffered']
    #allocation9 [shape = 's32[1]{0}', space=sflag, size = 0x4, scoped, tag = 'scoped memory for tpu_custom_call.1']
    #allocation10 [shape = 'u8[4096]{0}', space=vmem, size = 0x1000, scoped, tag = 'output window, operand 0, single buffered']
    %12 = vsyncpa [#allocation3], 0
    %13 = vsyncpa [#allocation6], 0
    %14 = vsyncpa [#allocation9], 0
    %15 = vsyncpa [#allocation4], 0
    // Predicated region
    $region2: #{tpu_custom_call.1} parent=1 // pred_check
      _
    $region3: #{tpu_custom_call.1} parent=1 // pred_check_branch
      %17 = sbr.rel (0) target = $region5
    $region4: #{tpu_custom_call.1} parent=1 // pred_region
      %19 = vsyncadd [#allocation3], 0
      %s21 = sshll.u32 %s0, 4
      %s22 = int_to_ptr.hbm [resolvable:$true] %s21
      %s23 = sshll.u32 [#allocation2], 4
      %s24 = int_to_ptr.vmem [resolvable:$true] %s23
      %26 = dma.hbm_to_vmem [thread:$0]  %s22, 64, %s24, [#allocation3]
    $region5: #{tpu_custom_call.1} parent=1 // pred_fallthru
      _
    // Predicated region
    $region6: #{tpu_custom_call.1} parent=1 // pred_check
      _
    $region7: #{tpu_custom_call.1} parent=1 // pred_check_branch
      %28 = sbr.rel (0) target = $region9
    $region8: #{tpu_custom_call.1} parent=1 // pred_region
      %30 = vsyncadd [#allocation6], 0
      %s31 = sshll.u32 %s1, 4
      %s32 = int_to_ptr.hbm [resolvable:$true] %s31
      %s33 = sshll.u32 [#allocation5], 4
      %s34 = int_to_ptr.vmem [resolvable:$true] %s33
      %39 = dma.hbm_to_vmem [thread:$0]  %s32, 1024, %s34, [#allocation6], 64, 64, 4
    $region9: #{tpu_custom_call.1} parent=1 // pred_fallthru
      _
    // Predicated region
    $region10: #{tpu_custom_call.1} parent=1 // pred_check
      _
    $region11: #{tpu_custom_call.1} parent=1 // pred_check_branch
      %41 = sbr.rel (0) target = $region13
    $region12: #{tpu_custom_call.1} parent=1 // pred_region
      _
    $region13: #{tpu_custom_call.1} parent=1 // pred_fallthru
      _
    // Predicated region
    $region14: #{tpu_custom_call.1} parent=1 // pred_check
      _
    $region15: #{tpu_custom_call.1} parent=1 // pred_check_branch
      %43 = sbr.rel (0) target = $region17
    $region16: #{tpu_custom_call.1} parent=1 // pred_region
      %45 = vsyncadd [#allocation6], 0
      %s46 = sshll.u32 %s3, 4
      %s47 = int_to_ptr.hbm [resolvable:$true] %s46
      %s48 = sshll.u32 [#allocation7], 4
      %s49 = int_to_ptr.vmem [resolvable:$true] %s48
      %54 = dma.hbm_to_vmem [thread:$0]  %s47, 1024, %s49, [#allocation6], 64, 64, 4
    $region17: #{tpu_custom_call.1} parent=1 // pred_fallthru
      _
    // Predicated region
    $region18: #{tpu_custom_call.1} parent=1 // pred_check
      _
    $region19: #{tpu_custom_call.1} parent=1 // pred_check_branch
      %56 = sbr.rel (0) target = $region21
    $region20: #{tpu_custom_call.1} parent=1 // pred_region
      _
    $region21: #{tpu_custom_call.1} parent=1 // pred_fallthru
      _
    // Predicated region
    $region22: #{tpu_custom_call.1} parent=1 // pred_check
      _
    $region23: #{tpu_custom_call.1} parent=1 // pred_check_branch
      %58 = sbr.rel (0) target = $region25
    $region24: #{tpu_custom_call.1} parent=1 // pred_region
      %60 = vsyncadd [#allocation9], 0
      %s61 = sshll.u32 %s5, 4
      %s62 = int_to_ptr.hbm [resolvable:$true] %s61
      %s63 = sshll.u32 [#allocation8], 4
      %s64 = int_to_ptr.vmem [resolvable:$true] %s63
      %69 = dma.hbm_to_vmem [thread:$0]  %s62, 1024, %s64, [#allocation9], 64, 64, 4
    $region25: #{tpu_custom_call.1} parent=1 // pred_fallthru
      _
    // Predicated region
    $region26: #{tpu_custom_call.1} parent=1 // pred_check
      _
    $region27: #{tpu_custom_call.1} parent=1 // pred_check_branch
      %71 = sbr.rel (0) target = $region29
    $region28: #{tpu_custom_call.1} parent=1 // pred_region
      _
    $region29: #{tpu_custom_call.1} parent=1 // pred_fallthru
      _
    // Predicated region
    $region30: #{tpu_custom_call.1} parent=1 // pred_check
      _
    $region31: #{tpu_custom_call.1} parent=1 // pred_check_branch
      %73 = sbr.rel (0) target = $region33
    $region32: #{tpu_custom_call.1} parent=1 // pred_region
      %75 = dma.done [#allocation3], 64
    $region33: #{tpu_custom_call.1} parent=1 // pred_fallthru
      _
    // Predicated region
    $region34: #{tpu_custom_call.1} parent=1 // pred_check
      _
    $region35: #{tpu_custom_call.1} parent=1 // pred_check_branch
      %77 = sbr.rel (0) target = $region37
    $region36: #{tpu_custom_call.1} parent=1 // pred_region
      %79 = dma.done [#allocation6], 1024
    $region37: #{tpu_custom_call.1} parent=1 // pred_fallthru
      _
    // Predicated region
    $region38: #{tpu_custom_call.1} parent=1 // pred_check
      _
    $region39: #{tpu_custom_call.1} parent=1 // pred_check_branch
      %81 = sbr.rel (0) target = $region41
    $region40: #{tpu_custom_call.1} parent=1 // pred_region
      %83 = dma.done [#allocation6], 1024
    $region41: #{tpu_custom_call.1} parent=1 // pred_fallthru
      _
    // Predicated region
    $region42: #{tpu_custom_call.1} parent=1 // pred_check
      _
    $region43: #{tpu_custom_call.1} parent=1 // pred_check_branch
      %85 = sbr.rel (0) target = $region45
    $region44: #{tpu_custom_call.1} parent=1 // pred_region
      %87 = dma.done [#allocation9], 1024
    $region45: #{tpu_custom_call.1} parent=1 // pred_fallthru
      _
    %v88 = vld [vmem:[#allocation2] sm:$0xf]
    %v89 = vld [vmem:[#allocation5] sm:$0xf]
    %v90 = vld [vmem:[#allocation5 + $0x4] sm:$0xf]
    %v91 = vld [vmem:[#allocation5 + $0x8] sm:$0xf]
    %v92 = vld [vmem:[#allocation5 + $0xc] sm:$0xf]
    %v93 = vld [vmem:[#allocation5 + $0x10] sm:$0xf]
    %v94 = vld [vmem:[#allocation5 + $0x14] sm:$0xf]
    %v95 = vld [vmem:[#allocation5 + $0x18] sm:$0xf]
    %v96 = vld [vmem:[#allocation5 + $0x1c] sm:$0xf]
    %v97 = vld [vmem:[#allocation5 + $0x20] sm:$0xf]
    %v98 = vld [vmem:[#allocation5 + $0x24] sm:$0xf]
    %v99 = vld [vmem:[#allocation5 + $0x28] sm:$0xf]
    %v100 = vld [vmem:[#allocation5 + $0x2c] sm:$0xf]
    %v101 = vld [vmem:[#allocation5 + $0x30] sm:$0xf]
    %v102 = vld [vmem:[#allocation5 + $0x34] sm:$0xf]
    %v103 = vld [vmem:[#allocation5 + $0x38] sm:$0xf]
    %v104 = vld [vmem:[#allocation5 + $0x3c] sm:$0xf]
    %v105 = vld [vmem:[%s2] sm:$0x1]
    %v107 = vperm.slane %v105, 0
    %v125 = vunpack.c.l.b16 %v89
    %v126 = vunpack.c.l.b16 %v90
    %v127 = vunpack.c.l.b16 %v91
    %v128 = vunpack.c.l.b16 %v92
    %v129 = vunpack.c.l.b16 %v93
    %v130 = vunpack.c.l.b16 %v94
    %v131 = vunpack.c.l.b16 %v95
    %v132 = vunpack.c.l.b16 %v96
    %v133 = vunpack.c.l.b16 %v97
    %v134 = vunpack.c.l.b16 %v98
    %v135 = vunpack.c.l.b16 %v99
    %v136 = vunpack.c.l.b16 %v100
    %v137 = vunpack.c.l.b16 %v101
    %v138 = vunpack.c.l.b16 %v102
    %v139 = vunpack.c.l.b16 %v103
    %v140 = vunpack.c.l.b16 %v104
    %v141 = vpack.c.b16 %v126, %v125
    %v142 = vpack.c.b16 %v128, %v127
    %v143 = vpack.c.b16 %v130, %v129
    %v144 = vpack.c.b16 %v132, %v131
    %v145 = vpack.c.b16 %v134, %v133
    %v146 = vpack.c.b16 %v136, %v135
    %v147 = vpack.c.b16 %v138, %v137
    %v148 = vpack.c.b16 %v140, %v139
    %157 = vmatpush.bf16.msra.mxu0 %v148
    %158 = vmatpush.bf16.msra.mxu0 %v147
    %159 = vmatpush.bf16.msra.mxu0 %v146
    %160 = vmatpush.bf16.msra.mxu0 %v145
    %161 = vmatpush.bf16.msra.mxu0 %v144
    %162 = vmatpush.bf16.msra.mxu0 %v143
    %163 = vmatpush.bf16.msra.mxu0 %v142
    %164 = vmatpush.bf16.msra.mxu0 %v141
    %165 = vmatmul.bf16.gmra.mxu0 %v88
    %v166 = vpop.f32.mrf.mxu0
    %v167 = vadd.f32 %v107, %v166
    %v168 = vpop.f32.mrf.mxu0
    %169 = vdwg.mxu0
    %v170 = vmax.f32 %v167, 0.0
    %v171 = vpack.c.bf16 %v170, %v170
    %v172 = vld [vmem:[#allocation7] sm:$0xf]
    %v173 = vld [vmem:[#allocation7 + $0x4] sm:$0xf]
    %v174 = vld [vmem:[#allocation7 + $0x8] sm:$0xf]
    %v175 = vld [vmem:[#allocation7 + $0xc] sm:$0xf]
    %v176 = vld [vmem:[#allocation7 + $0x10] sm:$0xf]
    %v177 = vld [vmem:[#allocation7 + $0x14] sm:$0xf]
    %v178 = vld [vmem:[#allocation7 + $0x18] sm:$0xf]
    %v179 = vld [vmem:[#allocation7 + $0x1c] sm:$0xf]
    %v180 = vld [vmem:[#allocation7 + $0x20] sm:$0xf]
    %v181 = vld [vmem:[#allocation7 + $0x24] sm:$0xf]
    %v182 = vld [vmem:[#allocation7 + $0x28] sm:$0xf]
    %v183 = vld [vmem:[#allocation7 + $0x2c] sm:$0xf]
    %v184 = vld [vmem:[#allocation7 + $0x30] sm:$0xf]
    %v185 = vld [vmem:[#allocation7 + $0x34] sm:$0xf]
    %v186 = vld [vmem:[#allocation7 + $0x38] sm:$0xf]
    %v187 = vld [vmem:[#allocation7 + $0x3c] sm:$0xf]
    %v188 = vld [vmem:[%s4] sm:$0x1]
    %v190 = vperm.slane %v188, 0
    %v208 = vunpack.c.l.b16 %v172
    %v209 = vunpack.c.l.b16 %v173
    %v210 = vunpack.c.l.b16 %v174
    %v211 = vunpack.c.l.b16 %v175
    %v212 = vunpack.c.l.b16 %v176
    %v213 = vunpack.c.l.b16 %v177
    %v214 = vunpack.c.l.b16 %v178
    %v215 = vunpack.c.l.b16 %v179
    %v216 = vunpack.c.l.b16 %v180
    %v217 = vunpack.c.l.b16 %v181
    %v218 = vunpack.c.l.b16 %v182
    %v219 = vunpack.c.l.b16 %v183
    %v220 = vunpack.c.l.b16 %v184
    %v221 = vunpack.c.l.b16 %v185
    %v222 = vunpack.c.l.b16 %v186
    %v223 = vunpack.c.l.b16 %v187
    %v224 = vpack.c.b16 %v209, %v208
    %v225 = vpack.c.b16 %v211, %v210
    %v226 = vpack.c.b16 %v213, %v212
    %v227 = vpack.c.b16 %v215, %v214
    %v228 = vpack.c.b16 %v217, %v216
    %v229 = vpack.c.b16 %v219, %v218
    %v230 = vpack.c.b16 %v221, %v220
    %v231 = vpack.c.b16 %v223, %v222
    %240 = vmatpush.bf16.msra.mxu0 %v231
    %241 = vmatpush.bf16.msra.mxu0 %v230
    %242 = vmatpush.bf16.msra.mxu0 %v229
    %243 = vmatpush.bf16.msra.mxu0 %v228
    %244 = vmatpush.bf16.msra.mxu0 %v227
    %245 = vmatpush.bf16.msra.mxu0 %v226
    %246 = vmatpush.bf16.msra.mxu0 %v225
    %247 = vmatpush.bf16.msra.mxu0 %v224
    %248 = vmatmul.bf16.gmra.mxu0 %v171
    %v249 = vpop.f32.mrf.mxu0
    %v250 = vadd.f32 %v190, %v249
    %v251 = vpop.f32.mrf.mxu0
    %252 = vdwg.mxu0
    %v253 = vmax.f32 %v250, 0.0
    %v254 = vpack.c.bf16 %v253, %v253
    %v255 = vld [vmem:[#allocation8] sm:$0xf]
    %v256 = vld [vmem:[#allocation8 + $0x4] sm:$0xf]
    %v257 = vld [vmem:[#allocation8 + $0x8] sm:$0xf]
    %v258 = vld [vmem:[#allocation8 + $0xc] sm:$0xf]
    %v259 = vld [vmem:[#allocation8 + $0x10] sm:$0xf]
    %v260 = vld [vmem:[#allocation8 + $0x14] sm:$0xf]
    %v261 = vld [vmem:[#allocation8 + $0x18] sm:$0xf]
    %v262 = vld [vmem:[#allocation8 + $0x1c] sm:$0xf]
    %v263 = vld [vmem:[#allocation8 + $0x20] sm:$0xf]
    %v264 = vld [vmem:[#allocation8 + $0x24] sm:$0xf]
    %v265 = vld [vmem:[#allocation8 + $0x28] sm:$0xf]
    %v266 = vld [vmem:[#allocation8 + $0x2c] sm:$0xf]
    %v267 = vld [vmem:[#allocation8 + $0x30] sm:$0xf]
    %v268 = vld [vmem:[#allocation8 + $0x34] sm:$0xf]
    %v269 = vld [vmem:[#allocation8 + $0x38] sm:$0xf]
    %v270 = vld [vmem:[#allocation8 + $0x3c] sm:$0xf]
    %v271 = vld [vmem:[%s6] sm:$0x1]
    %v273 = vperm.slane %v271, 0
    %v291 = vunpack.c.l.b16 %v255
    %v292 = vunpack.c.l.b16 %v256
    %v293 = vunpack.c.l.b16 %v257
    %v294 = vunpack.c.l.b16 %v258
    %v295 = vunpack.c.l.b16 %v259
    %v296 = vunpack.c.l.b16 %v260
    %v297 = vunpack.c.l.b16 %v261
    %v298 = vunpack.c.l.b16 %v262
    %v299 = vunpack.c.l.b16 %v263
    %v300 = vunpack.c.l.b16 %v264
    %v301 = vunpack.c.l.b16 %v265
    %v302 = vunpack.c.l.b16 %v266
    %v303 = vunpack.c.l.b16 %v267
    %v304 = vunpack.c.l.b16 %v268
    %v305 = vunpack.c.l.b16 %v269
    %v306 = vunpack.c.l.b16 %v270
    %v307 = vpack.c.b16 %v292, %v291
    %v308 = vpack.c.b16 %v294, %v293
    %v309 = vpack.c.b16 %v296, %v295
    %v310 = vpack.c.b16 %v298, %v297
    %v311 = vpack.c.b16 %v300, %v299
    %v312 = vpack.c.b16 %v302, %v301
    %v313 = vpack.c.b16 %v304, %v303
    %v314 = vpack.c.b16 %v306, %v305
    %323 = vmatpush.bf16.msra.mxu0 %v314
    %324 = vmatpush.bf16.msra.mxu0 %v313
    %325 = vmatpush.bf16.msra.mxu0 %v312
    %326 = vmatpush.bf16.msra.mxu0 %v311
    %327 = vmatpush.bf16.msra.mxu0 %v310
    %328 = vmatpush.bf16.msra.mxu0 %v309
    %329 = vmatpush.bf16.msra.mxu0 %v308
    %330 = vmatpush.bf16.msra.mxu0 %v307
    %331 = vmatmul.bf16.gmra.mxu0 %v254
    %v332 = vpop.f32.mrf.mxu0
    %v333 = vadd.f32 %v273, %v332
    %v334 = vpop.f32.mrf.mxu0
    %335 = vdwg.mxu0
    %v336 = vmax.f32 %v333, 0.0
    %337 = vst [vmem:[#allocation10] sm:$0xff] %v336
    // Predicated region
    $region46: #{tpu_custom_call.1} parent=1 // pred_check
      _
    $region47: #{tpu_custom_call.1} parent=1 // pred_check_branch
      %339 = sbr.rel (0) target = $region49
    $region48: #{tpu_custom_call.1} parent=1 // pred_region
      %341 = vsyncadd [#allocation4], 0
      %s343 = sshll.u32 [#allocation10], 4
      %s344 = int_to_ptr.vmem [resolvable:$true] %s343
      %s345 = sshll.u32 %s7, 4
      %s346 = int_to_ptr.hbm [resolvable:$true] %s345
      %348 = dma.vmem_to_hbm [thread:$0]  %s344, 128, %s346, [#allocation4]
    $region49: #{tpu_custom_call.1} parent=1 // pred_fallthru
      _
    // Predicated region
    $region50: #{tpu_custom_call.1} parent=1 // pred_check
      _
    $region51: #{tpu_custom_call.1} parent=1 // pred_check_branch
      %350 = sbr.rel (0) target = $region53
    $region52: #{tpu_custom_call.1} parent=1 // pred_region
      %352 = dma.done [#allocation4], 128
    $region53: #{tpu_custom_call.1} parent=1 // pred_fallthru
      _
    %353 = vsyncpa [#allocation3], 1
    %354 = vsyncpa [#allocation6], 1
    %355 = vsyncpa [#allocation9], 1
    %356 = vsyncpa [#allocation4], 1

// kernel: tpu_custom_call.1
$region0: #{tpu_custom_call.1}
  #allocation0 [shape = 'u32[]', space=smem, size = 0x4, offset = 0x4, fixed_abs, tag = 'smem constant byte address 0x4 - core index']
  #allocation1 [shape = 'u32[72,128]{1,0:T(1,128)}', space=vmem, size = 0x9000, scoped, tag = 'internal scratch']
  %s0 = inlined_call_operand.hbm [shape: bf16[8,128], index: 0, kind: input, shape index: {}]
  %s1 = inlined_call_operand.hbm [shape: bf16[128,128], index: 1, kind: input, shape index: {}]
  %s2 = inlined_call_operand.vmem [shape: f32[1,128], index: 2, kind: input, shape index: {}]
  %s3 = inlined_call_operand.hbm [shape: bf16[128,128], index: 3, kind: input, shape index: {}]
  %s4 = inlined_call_operand.vmem [shape: f32[1,128], index: 4, kind: input, shape index: {}]
  %s5 = inlined_call_operand.hbm [shape: bf16[128,128], index: 5, kind: input, shape index: {}]
  %s6 = inlined_call_operand.vmem [shape: f32[1,128], index: 6, kind: input, shape index: {}]
  %s7 = inlined_call_operand.hbm [shape: f32[8,128], index: 7, kind: output, shape index: {}]
  %s8 = sld [smem:[#allocation0]]
  $region54: #{tpu_custom_call.1} parent=0
    _
  %s10 = ssub.s32 1, %s8
  %s11 = scalar_select 0, %s10, %s8
  $region1: #{tpu_custom_call.1} parent=0
    #allocation2 [shape = 'u8[2048]{0}', space=vmem, size = 0x800, scoped, tag = 'input window, operand 0, single buffered']
    #allocation3 [shape = 's32[1]{0}', space=sflag, size = 0x4, scoped, tag = 'scoped memory for tpu_custom_call.1']
    #allocation4 [shape = 's32[1]{0}', space=sflag, size = 0x4, scoped, tag = 'scoped memory for tpu_custom_call.1']
    #allocation5 [shape = 'u8[32768]{0}', space=vmem, size = 0x8000, scoped, tag = 'input window, operand 1, single buffered']
    #allocation6 [shape = 's32[1]{0}', space=sflag, size = 0x4, scoped, tag = 'scoped memory for tpu_custom_call.1']
    #allocation7 [shape = 'u8[32768]{0}', space=vmem, size = 0x8000, scoped, tag = 'input window, operand 3, single buffered']
    #allocation8 [shape = 'u8[32768]{0}', space=vmem, size = 0x8000, scoped, tag = 'input window, operand 5, single buffered']
    #allocation9 [shape = 's32[1]{0}', space=sflag, size = 0x4, scoped, tag = 'scoped memory for tpu_custom_call.1']
    #allocation10 [shape = 'u8[4096]{0}', space=vmem, size = 0x1000, scoped, tag = 'output window, operand 0, single buffered']
    %12 = vsyncpa [#allocation3], 0
    %13 = vsyncpa [#allocation6], 0
    %14 = vsyncpa [#allocation9], 0
    %15 = vsyncpa [#allocation4], 0
    // Predicated region
    $region2: #{tpu_custom_call.1} parent=1 // pred_check
      _
    $region3: #{tpu_custom_call.1} parent=1 // pred_check_branch
      %17 = sbr.rel (0) target = $region5
    $region4: #{tpu_custom_call.1} parent=1 // pred_region
      %19 = vsyncadd [#allocation3], 0
      %s21 = sshll.u32 %s0, 4
      %s22 = int_to_ptr.hbm [resolvable:$true] %s21
      %s23 = sshll.u32 [#allocation2], 4
      %s24 = int_to_ptr.vmem [resolvable:$true] %s23
      %26 = dma.hbm_to_vmem [thread:$0]  %s22, 64, %s24, [#allocation3]
    $region5: #{tpu_custom_call.1} parent=1 // pred_fallthru
      _
    // Predicated region
    $region6: #{tpu_custom_call.1} parent=1 // pred_check
      _
    $region7: #{tpu_custom_call.1} parent=1 // pred_check_branch
      %28 = sbr.rel (0) target = $region9
    $region8: #{tpu_custom_call.1} parent=1 // pred_region
      %30 = vsyncadd [#allocation6], 0
      %s31 = sshll.u32 %s1, 4
      %s32 = int_to_ptr.hbm [resolvable:$true] %s31
      %s33 = sshll.u32 [#allocation5], 4
      %s34 = int_to_ptr.vmem [resolvable:$true] %s33
      %39 = dma.hbm_to_vmem [thread:$0]  %s32, 1024, %s34, [#allocation6], 64, 64, 4
    $region9: #{tpu_custom_call.1} parent=1 // pred_fallthru
      _
    // Predicated region
    $region10: #{tpu_custom_call.1} parent=1 // pred_check
      _
    $region11: #{tpu_custom_call.1} parent=1 // pred_check_branch
      %41 = sbr.rel (0) target = $region13
    $region12: #{tpu_custom_call.1} parent=1 // pred_region
      _
    $region13: #{tpu_custom_call.1} parent=1 // pred_fallthru
      _
    // Predicated region
    $region14: #{tpu_custom_call.1} parent=1 // pred_check
      _
    $region15: #{tpu_custom_call.1} parent=1 // pred_check_branch
      %43 = sbr.rel (0) target = $region17
    $region16: #{tpu_custom_call.1} parent=1 // pred_region
      %45 = vsyncadd [#allocation6], 0
      %s46 = sshll.u32 %s3, 4
      %s47 = int_to_ptr.hbm [resolvable:$true] %s46
      %s48 = sshll.u32 [#allocation7], 4
      %s49 = int_to_ptr.vmem [resolvable:$true] %s48
      %54 = dma.hbm_to_vmem [thread:$0]  %s47, 1024, %s49, [#allocation6], 64, 64, 4
    $region17: #{tpu_custom_call.1} parent=1 // pred_fallthru
      _
    // Predicated region
    $region18: #{tpu_custom_call.1} parent=1 // pred_check
      _
    $region19: #{tpu_custom_call.1} parent=1 // pred_check_branch
      %56 = sbr.rel (0) target = $region21
    $region20: #{tpu_custom_call.1} parent=1 // pred_region
      _
    $region21: #{tpu_custom_call.1} parent=1 // pred_fallthru
      _
    // Predicated region
    $region22: #{tpu_custom_call.1} parent=1 // pred_check
      _
    $region23: #{tpu_custom_call.1} parent=1 // pred_check_branch
      %58 = sbr.rel (0) target = $region25
    $region24: #{tpu_custom_call.1} parent=1 // pred_region
      %60 = vsyncadd [#allocation9], 0
      %s61 = sshll.u32 %s5, 4
      %s62 = int_to_ptr.hbm [resolvable:$true] %s61
      %s63 = sshll.u32 [#allocation8], 4
      %s64 = int_to_ptr.vmem [resolvable:$true] %s63
      %69 = dma.hbm_to_vmem [thread:$0]  %s62, 1024, %s64, [#allocation9], 64, 64, 4
    $region25: #{tpu_custom_call.1} parent=1 // pred_fallthru
      _
    // Predicated region
    $region26: #{tpu_custom_call.1} parent=1 // pred_check
      _
    $region27: #{tpu_custom_call.1} parent=1 // pred_check_branch
      %71 = sbr.rel (0) target = $region29
    $region28: #{tpu_custom_call.1} parent=1 // pred_region
      _
    $region29: #{tpu_custom_call.1} parent=1 // pred_fallthru
      _
    // Predicated region
    $region30: #{tpu_custom_call.1} parent=1 // pred_check
      _
    $region31: #{tpu_custom_call.1} parent=1 // pred_check_branch
      %73 = sbr.rel (0) target = $region33
    $region32: #{tpu_custom_call.1} parent=1 // pred_region
      %75 = dma.done [#allocation3], 64
    $region33: #{tpu_custom_call.1} parent=1 // pred_fallthru
      _
    // Predicated region
    $region34: #{tpu_custom_call.1} parent=1 // pred_check
      _
    $region35: #{tpu_custom_call.1} parent=1 // pred_check_branch
      %77 = sbr.rel (0) target = $region37
    $region36: #{tpu_custom_call.1} parent=1 // pred_region
      %79 = dma.done [#allocation6], 1024
    $region37: #{tpu_custom_call.1} parent=1 // pred_fallthru
      _
    // Predicated region
    $region38: #{tpu_custom_call.1} parent=1 // pred_check
      _
    $region39: #{tpu_custom_call.1} parent=1 // pred_check_branch
      %81 = sbr.rel (0) target = $region41
    $region40: #{tpu_custom_call.1} parent=1 // pred_region
      %83 = dma.done [#allocation6], 1024
    $region41: #{tpu_custom_call.1} parent=1 // pred_fallthru
      _
    // Predicated region
    $region42: #{tpu_custom_call.1} parent=1 // pred_check
      _
    $region43: #{tpu_custom_call.1} parent=1 // pred_check_branch
      %85 = sbr.rel (0) target = $region45
    $region44: #{tpu_custom_call.1} parent=1 // pred_region
      %87 = dma.done [#allocation9], 1024
    $region45: #{tpu_custom_call.1} parent=1 // pred_fallthru
      _
    %v88 = vld [vmem:[#allocation2] sm:$0xf]
    %v89 = vld [vmem:[#allocation5] sm:$0xf]
    %v90 = vld [vmem:[#allocation5 + $0x4] sm:$0xf]
    %v91 = vld [vmem:[#allocation5 + $0x8] sm:$0xf]
    %v92 = vld [vmem:[#allocation5 + $0xc] sm:$0xf]
    %v93 = vld [vmem:[#allocation5 + $0x10] sm:$0xf]
    %v94 = vld [vmem:[#allocation5 + $0x14] sm:$0xf]
    %v95 = vld [vmem:[#allocation5 + $0x18] sm:$0xf]
    %v96 = vld [vmem:[#allocation5 + $0x1c] sm:$0xf]
    %v97 = vld [vmem:[#allocation5 + $0x20] sm:$0xf]
    %v98 = vld [vmem:[#allocation5 + $0x24] sm:$0xf]
    %v99 = vld [vmem:[#allocation5 + $0x28] sm:$0xf]
    %v100 = vld [vmem:[#allocation5 + $0x2c] sm:$0xf]
    %v101 = vld [vmem:[#allocation5 + $0x30] sm:$0xf]
    %v102 = vld [vmem:[#allocation5 + $0x34] sm:$0xf]
    %v103 = vld [vmem:[#allocation5 + $0x38] sm:$0xf]
    %v104 = vld [vmem:[#allocation5 + $0x3c] sm:$0xf]
    %v105 = vld [vmem:[%s2] sm:$0x1]
    %v107 = vperm.slane %v105, 0
    %v125 = vunpack.c.l.b16 %v89
    %v126 = vunpack.c.l.b16 %v90
    %v127 = vunpack.c.l.b16 %v91
    %v128 = vunpack.c.l.b16 %v92
    %v129 = vunpack.c.l.b16 %v93
    %v130 = vunpack.c.l.b16 %v94
    %v131 = vunpack.c.l.b16 %v95
    %v132 = vunpack.c.l.b16 %v96
    %v133 = vunpack.c.l.b16 %v97
    %v134 = vunpack.c.l.b16 %v98
    %v135 = vunpack.c.l.b16 %v99
    %v136 = vunpack.c.l.b16 %v100
    %v137 = vunpack.c.l.b16 %v101
    %v138 = vunpack.c.l.b16 %v102
    %v139 = vunpack.c.l.b16 %v103
    %v140 = vunpack.c.l.b16 %v104
    %v141 = vpack.c.b16 %v126, %v125
    %v142 = vpack.c.b16 %v128, %v127
    %v143 = vpack.c.b16 %v130, %v129
    %v144 = vpack.c.b16 %v132, %v131
    %v145 = vpack.c.b16 %v134, %v133
    %v146 = vpack.c.b16 %v136, %v135
    %v147 = vpack.c.b16 %v138, %v137
    %v148 = vpack.c.b16 %v140, %v139
    %157 = vmatpush.bf16.msra.mxu0 %v148
    %158 = vmatpush.bf16.msra.mxu0 %v147
    %159 = vmatpush.bf16.msra.mxu0 %v146
    %160 = vmatpush.bf16.msra.mxu0 %v145
    %161 = vmatpush.bf16.msra.mxu0 %v144
    %162 = vmatpush.bf16.msra.mxu0 %v143
    %163 = vmatpush.bf16.msra.mxu0 %v142
    %164 = vmatpush.bf16.msra.mxu0 %v141
    %165 = vmatmul.bf16.gmra.mxu0 %v88
    %v166 = vpop.f32.mrf.mxu0
    %v167 = vadd.f32 %v107, %v166
    %v168 = vpop.f32.mrf.mxu0
    %169 = vdwg.mxu0
    %v170 = vmax.f32 %v167, 0.0
    %v171 = vpack.c.bf16 %v170, %v170
    %v172 = vld [vmem:[#allocation7] sm:$0xf]
    %v173 = vld [vmem:[#allocation7 + $0x4] sm:$0xf]
    %v174 = vld [vmem:[#allocation7 + $0x8] sm:$0xf]
    %v175 = vld [vmem:[#allocation7 + $0xc] sm:$0xf]
    %v176 = vld [vmem:[#allocation7 + $0x10] sm:$0xf]
    %v177 = vld [vmem:[#allocation7 + $0x14] sm:$0xf]
    %v178 = vld [vmem:[#allocation7 + $0x18] sm:$0xf]
    %v179 = vld [vmem:[#allocation7 + $0x1c] sm:$0xf]
    %v180 = vld [vmem:[#allocation7 + $0x20] sm:$0xf]
    %v181 = vld [vmem:[#allocation7 + $0x24] sm:$0xf]
    %v182 = vld [vmem:[#allocation7 + $0x28] sm:$0xf]
    %v183 = vld [vmem:[#allocation7 + $0x2c] sm:$0xf]
    %v184 = vld [vmem:[#allocation7 + $0x30] sm:$0xf]
    %v185 = vld [vmem:[#allocation7 + $0x34] sm:$0xf]
    %v186 = vld [vmem:[#allocation7 + $0x38] sm:$0xf]
    %v187 = vld [vmem:[#allocation7 + $0x3c] sm:$0xf]
    %v188 = vld [vmem:[%s4] sm:$0x1]
    %v190 = vperm.slane %v188, 0
    %v208 = vunpack.c.l.b16 %v172
    %v209 = vunpack.c.l.b16 %v173
    %v210 = vunpack.c.l.b16 %v174
    %v211 = vunpack.c.l.b16 %v175
    %v212 = vunpack.c.l.b16 %v176
    %v213 = vunpack.c.l.b16 %v177
    %v214 = vunpack.c.l.b16 %v178
    %v215 = vunpack.c.l.b16 %v179
    %v216 = vunpack.c.l.b16 %v180
    %v217 = vunpack.c.l.b16 %v181
    %v218 = vunpack.c.l.b16 %v182
    %v219 = vunpack.c.l.b16 %v183
    %v220 = vunpack.c.l.b16 %v184
    %v221 = vunpack.c.l.b16 %v185
    %v222 = vunpack.c.l.b16 %v186
    %v223 = vunpack.c.l.b16 %v187
    %v224 = vpack.c.b16 %v209, %v208
    %v225 = vpack.c.b16 %v211, %v210
    %v226 = vpack.c.b16 %v213, %v212
    %v227 = vpack.c.b16 %v215, %v214
    %v228 = vpack.c.b16 %v217, %v216
    %v229 = vpack.c.b16 %v219, %v218
    %v230 = vpack.c.b16 %v221, %v220
    %v231 = vpack.c.b16 %v223, %v222
    %240 = vmatpush.bf16.msra.mxu0 %v231
    %241 = vmatpush.bf16.msra.mxu0 %v230
    %242 = vmatpush.bf16.msra.mxu0 %v229
    %243 = vmatpush.bf16.msra.mxu0 %v228
    %244 = vmatpush.bf16.msra.mxu0 %v227
    %245 = vmatpush.bf16.msra.mxu0 %v226
    %246 = vmatpush.bf16.msra.mxu0 %v225
    %247 = vmatpush.bf16.msra.mxu0 %v224
    %248 = vmatmul.bf16.gmra.mxu0 %v171
    %v249 = vpop.f32.mrf.mxu0
    %v250 = vadd.f32 %v190, %v249
    %v251 = vpop.f32.mrf.mxu0
    %252 = vdwg.mxu0
    %v253 = vmax.f32 %v250, 0.0
    %v254 = vpack.c.bf16 %v253, %v253
    %v255 = vld [vmem:[#allocation8] sm:$0xf]
    %v256 = vld [vmem:[#allocation8 + $0x4] sm:$0xf]
    %v257 = vld [vmem:[#allocation8 + $0x8] sm:$0xf]
    %v258 = vld [vmem:[#allocation8 + $0xc] sm:$0xf]
    %v259 = vld [vmem:[#allocation8 + $0x10] sm:$0xf]
    %v260 = vld [vmem:[#allocation8 + $0x14] sm:$0xf]
    %v261 = vld [vmem:[#allocation8 + $0x18] sm:$0xf]
    %v262 = vld [vmem:[#allocation8 + $0x1c] sm:$0xf]
    %v263 = vld [vmem:[#allocation8 + $0x20] sm:$0xf]
    %v264 = vld [vmem:[#allocation8 + $0x24] sm:$0xf]
    %v265 = vld [vmem:[#allocation8 + $0x28] sm:$0xf]
    %v266 = vld [vmem:[#allocation8 + $0x2c] sm:$0xf]
    %v267 = vld [vmem:[#allocation8 + $0x30] sm:$0xf]
    %v268 = vld [vmem:[#allocation8 + $0x34] sm:$0xf]
    %v269 = vld [vmem:[#allocation8 + $0x38] sm:$0xf]
    %v270 = vld [vmem:[#allocation8 + $0x3c] sm:$0xf]
    %v271 = vld [vmem:[%s6] sm:$0x1]
    %v273 = vperm.slane %v271, 0
    %v291 = vunpack.c.l.b16 %v255
    %v292 = vunpack.c.l.b16 %v256
    %v293 = vunpack.c.l.b16 %v257
    %v294 = vunpack.c.l.b16 %v258
    %v295 = vunpack.c.l.b16 %v259
    %v296 = vunpack.c.l.b16 %v260
    %v297 = vunpack.c.l.b16 %v261
    %v298 = vunpack.c.l.b16 %v262
    %v299 = vunpack.c.l.b16 %v263
    %v300 = vunpack.c.l.b16 %v264
    %v301 = vunpack.c.l.b16 %v265
    %v302 = vunpack.c.l.b16 %v266
    %v303 = vunpack.c.l.b16 %v267
    %v304 = vunpack.c.l.b16 %v268
    %v305 = vunpack.c.l.b16 %v269
    %v306 = vunpack.c.l.b16 %v270
    %v307 = vpack.c.b16 %v292, %v291
    %v308 = vpack.c.b16 %v294, %v293
    %v309 = vpack.c.b16 %v296, %v295
    %v310 = vpack.c.b16 %v298, %v297
    %v311 = vpack.c.b16 %v300, %v299
    %v312 = vpack.c.b16 %v302, %v301
    %v313 = vpack.c.b16 %v304, %v303
    %v314 = vpack.c.b16 %v306, %v305
    %323 = vmatpush.bf16.msra.mxu0 %v314
    %324 = vmatpush.bf16.msra.mxu0 %v313
    %325 = vmatpush.bf16.msra.mxu0 %v312
    %326 = vmatpush.bf16.msra.mxu0 %v311
    %327 = vmatpush.bf16.msra.mxu0 %v310
    %328 = vmatpush.bf16.msra.mxu0 %v309
    %329 = vmatpush.bf16.msra.mxu0 %v308
    %330 = vmatpush.bf16.msra.mxu0 %v307
    %331 = vmatmul.bf16.gmra.mxu0 %v254
    %v332 = vpop.f32.mrf.mxu0
    %v333 = vadd.f32 %v273, %v332
    %v334 = vpop.f32.mrf.mxu0
    %335 = vdwg.mxu0
    %v336 = vmax.f32 %v333, 0.0
    %337 = vst [vmem:[#allocation10] sm:$0xff] %v336
    // Predicated region
    $region46: #{tpu_custom_call.1} parent=1 // pred_check
      _
    $region47: #{tpu_custom_call.1} parent=1 // pred_check_branch
      %339 = sbr.rel (0) target = $region49
    $region48: #{tpu_custom_call.1} parent=1 // pred_region
      %341 = vsyncadd [#allocation4], 0
      %s343 = sshll.u32 [#allocation10], 4
      %s344 = int_to_ptr.vmem [resolvable:$true] %s343
      %s345 = sshll.u32 %s7, 4
      %s346 = int_to_ptr.hbm [resolvable:$true] %s345
      %348 = dma.vmem_to_hbm [thread:$0]  %s344, 128, %s346, [#allocation4]
    $region49: #{tpu_custom_call.1} parent=1 // pred_fallthru
      _
    // Predicated region
    $region50: #{tpu_custom_call.1} parent=1 // pred_check
      _
    $region51: #{tpu_custom_call.1} parent=1 // pred_check_branch
      %350 = sbr.rel (0) target = $region53
    $region52: #{tpu_custom_call.1} parent=1 // pred_region
      %352 = dma.done [#allocation4], 128
    $region53: #{tpu_custom_call.1} parent=1 // pred_fallthru
      _
    %353 = vsyncpa [#allocation3], 1
    %354 = vsyncpa [#allocation6], 1
    %355 = vsyncpa [#allocation9], 1
    %356 = vsyncpa [#allocation4], 1

</llo_original>
